<compile_context>
chip_gen: v6e
topology: v6e:2x2x1
jax: 0.10.0
libtpu: 0.0.40
codegen_flags: <defaults>
</compile_context>

<pallas_src>
import functools

import jax
import jax.numpy as jnp
from jax.experimental import pallas as pl
from jax.experimental.pallas import tpu as pltpu

_MIB = 1024 * 1024


def _contrastive_loss_kernel(
    x1_ref, x2_ref, label_ref, out_ref, acc_ref,
    *, margin, eps, batch, block_rows, tiles_per_core, need_mask,
    label_resident, single_tile,
):
    c = pl.program_id(0)   # core-split index ("parallel")
    t = pl.program_id(1)   # tile index within this core's slice ("arbitrary")

    @pl.when(t == 0)
    def _():
        acc_ref[...] = jnp.zeros_like(acc_ref)

    tile_idx = c * tiles_per_core + t
    row0 = tile_idx * block_rows          # first batch row of this tile (unclamped)

    def accumulate(apply_row_mask):
        x1 = x1_ref[...].astype(jnp.float32)        # (TB, D)
        x2 = x2_ref[...].astype(jnp.float32)        # (TB, D)

        if label_resident:
            if single_tile:
                label = label_ref[...].astype(jnp.float32)              # (TB, 1)
            else:
                start = pl.multiple_of(row0, block_rows)
                label = label_ref[pl.ds(start, block_rows), :].astype(jnp.float32)
        else:
            label = label_ref[...].astype(jnp.float32)                  # (TB, 1)

        # torch.nn.functional.pairwise_distance: ||x1 - x2 + eps||_2 over last dim.
        diff = x1 - x2 + eps
        dist_sq = jnp.sum(diff * diff, axis=-1, keepdims=True)   # (TB, 1)
        dist = jnp.sqrt(dist_sq)                                  # only for margin term

        pos = (1.0 - label) * dist_sq                             # = (1-label) * d**2
        neg = label * jnp.square(jnp.maximum(margin - dist, 0.0))
        loss = pos + neg                                          # (TB, 1)

        if apply_row_mask:
            # Discard rows past the true batch (partial edge tile).
            rows = row0 + jax.lax.broadcasted_iota(jnp.int32, loss.shape, 0)
            loss = jnp.where(rows < batch, loss, 0.0)

        acc_ref[...] += jnp.sum(loss, keepdims=True)              # (1, 1)

    if need_mask:
        # Skip fully out-of-range (dead duplicate) tiles entirely; only live
        # tiles pay the iota/where, and only the edge tile needs it.
        @pl.when(row0 < batch)
        def _():
            accumulate(apply_row_mask=True)
    else:
        accumulate(apply_row_mask=False)

    @pl.when(t == tiles_per_core - 1)
    def _():
        # Per-core partial of the mean, broadcast into a lane-dense (8,128) slab.
        out_ref[...] = jnp.broadcast_to(acc_ref[...] * (1.0 / batch), out_ref.shape)


def _sublane_multiple(dtype):
    # Sub-32-bit dtypes pack along sublanes: 8 rows (f32), 16 (bf16), 32 (int8/fp8).
    return max(8, 32 // jnp.dtype(dtype).itemsize)


def _device_kind():
    try:
        return jax.devices()[0].device_kind.lower()
    except Exception:
        return ""


def _vmem_capacity_bytes():
    # Per-TensorCore VMEM: 128 MiB on v5e/v6e, 64 MiB on v7x.  Conservative
    # (v7x) fallback if the query is unavailable.
    try:
        info = pltpu.get_tpu_info()
        return int(getattr(info, "vmem_capacity_bytes", 64 * _MIB))
    except Exception:
        return 64 * _MIB


def _default_core_splits():
    # Two TensorCores per chip on v7x (and megacore v4/v5p); one on v5e/v6e,
    # where the core axis would only be a serial loop with wasted mask work.
    kind = _device_kind()
    return 2 if any(tag in kind for tag in ("v7", "v4", "v5p")) else 1


def _pick_block_rows(batch, dim, itemsize, budget_bytes, sublane):
    """Largest row tile s.t. 2 inputs x 2 pipeline buffers fit budget_bytes."""
    max_rows = max(sublane, budget_bytes // (4 * dim * itemsize))
    if batch <= max_rows:
        return batch                      # single full block per core slice
    return max(sublane, (max_rows // sublane) * sublane)


def contrastive_loss(output1, output2, label, margin=2.0, eps=1e-6,
                     block_rows=None, num_core_splits=None, input_dtype=None):
    """Pallas TPU implementation of ContrastiveLoss.forward.  Returns a scalar.

    input_dtype: optionally downcast the embeddings (e.g. jnp.bfloat16) before
      the kernel to halve HBM traffic; the kernel always computes in f32.
    """
    output1 = jnp.asarray(output1)
    output2 = jnp.asarray(output2)
    B, D = output1.shape
    assert output2.shape == (B, D)
    label = jnp.asarray(label).reshape(B, 1).astype(jnp.float32)

    if input_dtype is not None and output1.dtype != jnp.dtype(input_dtype):
        output1 = output1.astype(input_dtype)
        output2 = output2.astype(input_dtype)

    itemsize = jnp.dtype(output1.dtype).itemsize
    sublane = _sublane_multiple(output1.dtype)

    # Per-generation VMEM geometry (review): big tiles on 128 MiB v5e/v6e,
    # conservative tiles on 64 MiB-per-TC v7x (also the unknown-chip fallback).
    if _vmem_capacity_bytes() >= 96 * _MIB:   # v5e / v6e
        tile_budget, vmem_limit = 40 * _MIB, 64 * _MIB
    else:                                     # v7x or unknown
        tile_budget, vmem_limit = 24 * _MIB, 32 * _MIB

    if block_rows is None:
        block_rows = _pick_block_rows(B, D, itemsize, tile_budget, sublane)
    if not (block_rows == B or block_rows % sublane == 0):
        raise ValueError(f"block_rows must be B or a multiple of {sublane}")

    tb = block_rows
    nblocks = pl.cdiv(B, tb)
    if num_core_splits is None:
        num_core_splits = _default_core_splits()
    nc = max(1, min(num_core_splits, nblocks))   # core splits actually used
    t_per_core = pl.cdiv(nblocks, nc)
    padded_rows = nc * t_per_core * tb
    need_mask = padded_rows != B
    single_tile = (nc == 1 and t_per_core == 1)

    def in_map(c, t):
        # Clamp so a trailing dead tile re-uses the previous block index; Pallas
        # skips the copy when the index is unchanged, so the clamp costs no
        # extra HBM traffic and its compute is skipped by pl.when in the kernel.
        return (jnp.minimum(c * t_per_core + t, nblocks - 1), 0)

    # Label: resident in VMEM (one DMA total, sliced in-kernel) whenever its
    # lane-padded footprint is small; otherwise stream (tb, 1) blocks.
    label_resident = padded_rows <= 8192
    if label_resident:
        if padded_rows != B:
            label = jnp.pad(label, ((0, padded_rows - B), (0, 0)))
        label_spec = pl.BlockSpec((padded_rows, 1), lambda c, t: (0, 0))
    else:
        label_spec = pl.BlockSpec((tb, 1), in_map)

    kernel = functools.partial(
        _contrastive_loss_kernel,
        margin=float(margin), eps=float(eps), batch=B,
        block_rows=tb, tiles_per_core=t_per_core, need_mask=need_mask,
        label_resident=label_resident, single_tile=single_tile,
    )

    partials = pl.pallas_call(
        kernel,
        out_shape=jax.ShapeDtypeStruct((nc * 8, 128), jnp.float32),
        grid=(nc, t_per_core),
        in_specs=[
            pl.BlockSpec((tb, D), in_map),
            pl.BlockSpec((tb, D), in_map),
            label_spec,
        ],
        # One lane-dense (8, 128) slab per core, resident across the reduction axis.
        out_specs=pl.BlockSpec((8, 128), lambda c, t: (c, 0)),
        scratch_shapes=[pltpu.VMEM((1, 1), jnp.float32)],
        compiler_params=pltpu.CompilerParams(
            dimension_semantics=("parallel", "arbitrary"),
            vmem_limit_bytes=vmem_limit,
        ),
    )(output1, output2, label)

    # Each core's slab holds its partial (already divided by B) in every element.
    return jnp.sum(partials[::8, 0])


def _reference(output1, output2, label, margin=2.0, eps=1e-6):
    diff = output1 - output2 + eps
    dist = jnp.sqrt(jnp.sum(diff * diff, axis=-1, keepdims=True))
    loss = (1.0 - label) * dist**2 + label * jnp.square(
        jnp.maximum(margin - dist, 0.0)
    )
    return jnp.mean(loss)


if __name__ == "__main__":
    # Small deterministic example: batch=20 pairs of 128-d (lane-dense) embeddings.
    B, D = 20, 128
    key = jax.random.PRNGKey(0)
    k1, k2, k3 = jax.random.split(key, 3)

    output1 = jax.random.normal(k1, (B, D), dtype=jnp.float32)
    output2 = jax.random.normal(k2, (B, D), dtype=jnp.float32)
    # label in {0, 1}: 0 = similar pair, 1 = dissimilar pair
    label = jax.random.bernoulli(k3, 0.5, (B, 1)).astype(jnp.float32)

    ref = _reference(output1, output2, label, margin=2.0)

    # 1) Tiled / masked / core-split path (grid=(2,2), TB=8): exercises dead-tile
    #    gating, edge-row mask, resident-label slicing and per-core slabs.
    loss_tiled = contrastive_loss(output1, output2, label, margin=2.0,
                                  block_rows=8, num_core_splits=2)
    jax.block_until_ready(loss_tiled)
    assert jnp.allclose(loss_tiled, ref, rtol=1e-5, atol=1e-5), (loss_tiled, ref)

    # 2) Auto-sized single-block path with chip-derived defaults.
    loss_auto = contrastive_loss(output1, output2, label, margin=2.0)
    jax.block_until_ready(loss_auto)
    assert jnp.allclose(loss_auto, ref, rtol=1e-5, atol=1e-5), (loss_auto, ref)

    # 3) bf16 embedding path (halves HBM traffic on this bandwidth-bound kernel);
    #    compared against a reference on the same bf16-rounded inputs.
    loss_bf16 = contrastive_loss(output1, output2, label, margin=2.0,
                                 input_dtype=jnp.bfloat16, block_rows=16)
    jax.block_until_ready(loss_bf16)
    ref_bf16 = _reference(output1.astype(jnp.bfloat16).astype(jnp.float32),
                          output2.astype(jnp.bfloat16).astype(jnp.float32),
                          label, margin=2.0)
    assert jnp.allclose(loss_bf16, ref_bf16, rtol=1e-2, atol=1e-2), (loss_bf16, ref_bf16)

    print("KERNEL_OK")
</pallas_src>

<mosaic_0001>
module attributes {stable_mosaic.version = 11 : i64} {
  func.func @_contrastive_loss_kernel(%arg0: i32, %arg1: i32, %arg2: memref<8x128xf32, #tpu.memory_space<vmem>>, %arg3: memref<8x128xf32, #tpu.memory_space<vmem>>, %arg4: memref<32x1xf32, #tpu.memory_space<vmem>>, %arg5: memref<8x128xf32, #tpu.memory_space<vmem>>, %arg6: memref<1x1xf32, #tpu.memory_space<vmem>>) attributes {dimension_semantics = [#tpu.dimension_semantics<parallel>, #tpu.dimension_semantics<arbitrary>], iteration_bounds = array<i64: 2, 2>, scalar_prefetch = 0 : i64, scratch_operands = 1 : i64, tpu.core_type = #tpu.core_type<tc>, window_params = [{transform_indices = @transform_0, window_bounds = array<i64: 8, 128>}, {transform_indices = @transform_1, window_bounds = array<i64: 8, 128>}, {pipeline_mode = #tpu.pipeline_mode<synchronous>, transform_indices = @transform_2, window_bounds = array<i64: 32, 1>}, {transform_indices = @transform_3, window_bounds = array<i64: 8, 128>}]} {
    %c0_i32 = arith.constant 0 : i32
    %0 = arith.cmpi eq, %arg1, %c0_i32 : i32
    %1 = arith.extui %0 : i1 to i32
    %c0_i32_0 = arith.constant 0 : i32
    %2 = arith.cmpi ne, %1, %c0_i32_0 : i32
    scf.if %2 {
      %cst = arith.constant 0.000000e+00 : f32
      %12 = vector.broadcast %cst : f32 to vector<1x1xf32>
      %c0 = arith.constant 0 : index
      %c0_3 = arith.constant 0 : index
      %13 = vector.load %arg6[%c0, %c0_3] : memref<1x1xf32, #tpu.memory_space<vmem>>, vector<1x1xf32>
      tpu.vector_store %arg6[%c0, %c0_3], %12 {strides = array<i32>} : memref<1x1xf32, #tpu.memory_space<vmem>>, vector<1x1xf32>,
    } else {
    }
    %c2_i32 = arith.constant 2 : i32
    %3 = arith.muli %arg0, %c2_i32 : i32
    %4 = arith.addi %3, %arg1 : i32
    %c8_i32 = arith.constant 8 : i32
    %5 = arith.muli %4, %c8_i32 : i32
    %c20_i32 = arith.constant 20 : i32
    %6 = arith.cmpi slt, %5, %c20_i32 : i32
    %7 = arith.extui %6 : i1 to i32
    %c0_i32_1 = arith.constant 0 : i32
    %8 = arith.cmpi ne, %7, %c0_i32_1 : i32
    scf.if %8 {
      %c0 = arith.constant 0 : index
      %c0_3 = arith.constant 0 : index
      %12 = vector.load %arg2[%c0, %c0_3] : memref<8x128xf32, #tpu.memory_space<vmem>>, vector<8x128xf32>
      %c0_4 = arith.constant 0 : index
      %c0_5 = arith.constant 0 : index
      %13 = vector.load %arg3[%c0_4, %c0_5] : memref<8x128xf32, #tpu.memory_space<vmem>>, vector<8x128xf32>
      %14 = tpu.assume_multiple %5, 8 : i32
      %15 = arith.index_cast %14 : i32 to index
      %c0_6 = arith.constant 0 : index
      %16 = vector.load %arg4[%15, %c0_6] : memref<32x1xf32, #tpu.memory_space<vmem>>, vector<8x1xf32>
      %17 = arith.subf %12, %13 : vector<8x128xf32>
      %cst = arith.constant 9.99999997E-7 : f32
      %18 = vector.broadcast %cst : f32 to vector<8x128xf32>
      %19 = arith.addf %17, %18 : vector<8x128xf32>
      %20 = arith.mulf %19, %19 : vector<8x128xf32>
      %cst_7 = arith.constant dense<0.000000e+00> : vector<8xf32>
      %21 = vector.multi_reduction <add>, %20, %cst_7 [1] : vector<8x128xf32> to vector<8xf32>
      %22 = vector.shape_cast %21 : vector<8xf32> to vector<8x1xf32>
      %23 = math.sqrt %22 : vector<8x1xf32>
      %cst_8 = arith.constant 1.000000e+00 : f32
      %24 = vector.broadcast %cst_8 : f32 to vector<8x1xf32>
      %25 = arith.subf %24, %16 : vector<8x1xf32>
      %26 = arith.mulf %25, %22 : vector<8x1xf32>
      %cst_9 = arith.constant 2.000000e+00 : f32
      %27 = vector.broadcast %cst_9 : f32 to vector<8x1xf32>
      %28 = arith.subf %27, %23 : vector<8x1xf32>
      %cst_10 = arith.constant 0.000000e+00 : f32
      %29 = vector.broadcast %cst_10 : f32 to vector<8x1xf32>
      %30 = arith.maximumf %28, %29 : vector<8x1xf32>
      %31 = arith.mulf %30, %30 : vector<8x1xf32>
      %32 = arith.mulf %16, %31 : vector<8x1xf32>
      %33 = arith.addf %26, %32 : vector<8x1xf32>
      %34 = tpu.iota {dimensions = array<i32: 0>} : vector<8x1xi32>
      %35 = vector.broadcast %5 : i32 to vector<8x1xi32>
      %36 = arith.addi %35, %34 : vector<8x1xi32>
      %c20_i32_11 = arith.constant 20 : i32
      %37 = vector.broadcast %c20_i32_11 : i32 to vector<8x1xi32>
      %38 = arith.cmpi slt, %36, %37 : vector<8x1xi32>
      %cst_12 = arith.constant 0.000000e+00 : f32
      %39 = vector.broadcast %cst_12 : f32 to vector<8x1xf32>
      %40 = arith.select %38, %33, %39 : vector<8x1xi1>, vector<8x1xf32>
      %c0_13 = arith.constant 0 : index
      %c0_14 = arith.constant 0 : index
      %41 = vector.load %arg6[%c0_13, %c0_14] : memref<1x1xf32, #tpu.memory_space<vmem>>, vector<1x1xf32>
      %42 = vector.shape_cast %40 : vector<8x1xf32> to vector<1x8x1xf32>
      %cst_15 = arith.constant dense<0.000000e+00> : vector<1xf32>
      %43 = vector.multi_reduction <add>, %42, %cst_15 [1, 2] : vector<1x8x1xf32> to vector<1xf32>
      %44 = vector.shape_cast %43 : vector<1xf32> to vector<1x1x1xf32>
      %45 = vector.extract %44[0, 0, 0] : f32 from vector<1x1x1xf32>
      %46 = vector.broadcast %45 : f32 to vector<1x1xf32>
      %47 = arith.addf %41, %46 : vector<1x1xf32>
      %c0_16 = arith.constant 0 : index
      %c0_17 = arith.constant 0 : index
      %48 = vector.load %arg6[%c0_16, %c0_17] : memref<1x1xf32, #tpu.memory_space<vmem>>, vector<1x1xf32>
      tpu.vector_store %arg6[%c0_16, %c0_17], %47 {strides = array<i32>} : memref<1x1xf32, #tpu.memory_space<vmem>>, vector<1x1xf32>,
    } else {
    }
    %c1_i32 = arith.constant 1 : i32
    %9 = arith.cmpi eq, %arg1, %c1_i32 : i32
    %10 = arith.extui %9 : i1 to i32
    %c0_i32_2 = arith.constant 0 : i32
    %11 = arith.cmpi ne, %10, %c0_i32_2 : i32
    scf.if %11 {
      %c0 = arith.constant 0 : index
      %c0_3 = arith.constant 0 : index
      %12 = vector.load %arg6[%c0, %c0_3] : memref<1x1xf32, #tpu.memory_space<vmem>>, vector<1x1xf32>
      %cst = arith.constant 5.000000e-02 : f32
      %13 = vector.broadcast %cst : f32 to vector<1x1xf32>
      %14 = arith.mulf %12, %13 : vector<1x1xf32>
      %15 = vector.shape_cast %14 : vector<1x1xf32> to vector<1x1xf32>
      %16 = vector.broadcast %15 : vector<1x1xf32> to vector<8x128xf32>
      %c0_4 = arith.constant 0 : index
      %c0_5 = arith.constant 0 : index
      %17 = vector.load %arg5[%c0_4, %c0_5] : memref<8x128xf32, #tpu.memory_space<vmem>>, vector<8x128xf32>
      tpu.vector_store %arg5[%c0_4, %c0_5], %16 {strides = array<i32>} : memref<8x128xf32, #tpu.memory_space<vmem>>, vector<8x128xf32>,
    } else {
    }
    return
  }
  func.func @transform_0(%arg0: i32, %arg1: i32) -> (i32, i32) {
    %c2_i32 = arith.constant 2 : i32
    %0 = arith.muli %arg0, %c2_i32 : i32
    %1 = arith.addi %0, %arg1 : i32
    %c2_i32_0 = arith.constant 2 : i32
    %2 = arith.minsi %1, %c2_i32_0 : i32
    %c0_i32 = arith.constant 0 : i32
    %c0_i32_1 = arith.constant 0 : i32
    return %2, %c0_i32 : i32, i32
  }
  func.func @transform_1(%arg0: i32, %arg1: i32) -> (i32, i32) {
    %c2_i32 = arith.constant 2 : i32
    %0 = arith.muli %arg0, %c2_i32 : i32
    %1 = arith.addi %0, %arg1 : i32
    %c2_i32_0 = arith.constant 2 : i32
    %2 = arith.minsi %1, %c2_i32_0 : i32
    %c0_i32 = arith.constant 0 : i32
    %c0_i32_1 = arith.constant 0 : i32
    return %2, %c0_i32 : i32, i32
  }
  func.func @transform_2(%arg0: i32, %arg1: i32) -> (i32, i32) {
    %c0_i32 = arith.constant 0 : i32
    %c0_i32_0 = arith.constant 0 : i32
    %c0_i32_1 = arith.constant 0 : i32
    return %c0_i32, %c0_i32_0 : i32, i32
  }
  func.func @transform_3(%arg0: i32, %arg1: i32) -> (i32, i32) {
    %c0_i32 = arith.constant 0 : i32
    %c0_i32_0 = arith.constant 0 : i32
    return %arg0, %c0_i32 : i32, i32
  }
}

</mosaic_0001>

<llo_original>
// kernel: tpu_custom_call.1
$region0: #{tpu_custom_call.1}
  #allocation0 [shape = 'u32[]', space=smem, size = 0x4, offset = 0x4, fixed_abs, tag = 'smem constant byte address 0x4 - core index']
  #allocation1 [shape = 'u32[144,128]{1,0:T(1,128)}', space=vmem, size = 0x12000, scoped, tag = 'internal scratch']
  #allocation2 [shape = 'f32[1,1]{1,0:T(1,128)}', space=vmem, size = 0x200, scoped, tag = 'scratch operand']
  %s0 = inlined_call_operand.vmem [shape: f32[20,128], index: 0, kind: input, shape index: {}]
  %s1 = inlined_call_operand.hbm [shape: f32[20,128], index: 1, kind: input, shape index: {}]
  %s2 = inlined_call_operand.vmem [shape: f32[32,1], index: 2, kind: input, shape index: {}]
  %s3 = inlined_call_operand.hbm [shape: f32[16,128], index: 3, kind: output, shape index: {}]
  %s4 = sld [smem:[#allocation0]]
  $region61: #{tpu_custom_call.1} parent=0
    _
  %s6 = ssub.s32 1, %s4
  %s7 = scalar_select 0, %s6, %s4
  $region1: #{tpu_custom_call.1} parent=0
    #allocation3 [shape = 'u8[8192]{0}', space=vmem, size = 0x2000, scoped, tag = 'input window, operand 1']
    #allocation4 [shape = 's32[2]{0}', space=sflag, size = 0x8, scoped, tag = 'scoped memory for tpu_custom_call.1']
    #allocation5 [shape = 's32[2]{0}', space=sflag, size = 0x8, scoped, tag = 'scoped memory for tpu_custom_call.1']
    #allocation6 [shape = 'u8[8192]{0}', space=vmem, size = 0x2000, scoped, tag = 'output window, operand 0']
    %8 = vsyncpa [#allocation4], 0
    %s9 = scalar_lea.sflag [#allocation4], 1
    %10 = vsyncpa %s9, 0
    %11 = vsyncpa [#allocation5], 0
    %s12 = scalar_lea.sflag [#allocation5], 1
    %13 = vsyncpa %s12, 0
    loop: start=0, step=1, limit=6
    $region2: #{tpu_custom_call.1} parent=1 // loop_pre_header
      _
    $region3: #{tpu_custom_call.1} parent=1 // loop_header
      %s15 = sphi 0, %s19
      %p16 = scmp.ge.s32.totalorder %s15, 6
      %s22 = sphi 0, %s34
      %s23 = sphi 0, %s30
      %s24 = sphi 0, %s22
      %s25 = sphi 0, %s23
      %s26 = sphi 0, %s24
      %s27 = sphi 0, %s25
      %s45 = sphi 0, %s47
      %s48 = sphi 0, %s45
      %s49 = sphi 0, %s48
      %s65 = sphi 0, %s49
      %s79 = sphi 0, %s81
      %s82 = sphi 0, %s79
      %s83 = sphi 0, %s82
      %s99 = sphi 0, %s83
      %s103 = sphi 0, %s103
      %s105 = sphi 0, %s103
      %s106 = sphi 0, %s105
      %s120 = sphi 0, %s106
      %s126 = sphi 0, %s128
      %s129 = sphi 0, %s126
      %s130 = sphi 0, %s129
      %s146 = sphi 0, %s130
    $region4: #{tpu_custom_call.1} parent=1 // loop_header_branch
      %18 = sbr.rel (%p16) target = $region8
    $region5: #{tpu_custom_call.1} parent=1 // loop_body
      %s20 = ssub.s32 %s15, 1
      %s21 = ssub.s32 %s15, 2
      %s28 = sadd.s32 1, %s23
      %p29 = scmp.ge.s32.totalorder %s28, 2
      %s30 = scalar_select %p29, 0, %s28
      %s31 = sadd.s32 1, %s22
      %s32 = scalar_select %p29, %s31, %s22
      %p33 = scmp.ge.s32.totalorder %s32, 2
      %s34 = scalar_select %p33, 0, %s32
      %s35 = smul.u32 %s22, 2
      %s36 = sadd.s32 %s35, %s23
      %p37 = scmp.lt.s32.totalorder %s36, 2
      %s38 = scalar_select %p37, %s36, 2
      %s39 = smul.u32 %s34, 2
      %s40 = sadd.s32 %s39, %s30
      %p41 = scmp.lt.s32.totalorder %s40, 2
      %s42 = scalar_select %p41, %s40, 2
      %s43 = ssub.s32 %s38, %s42
      %p44 = scmp.eq.s32.totalorder %s43, 0
      %s46 = sadd.s32 %s45, 1
      %s47 = scalar_select %p44, %s45, %s46
      %p50 = pneg %p44
      %p51 = scmp.eq.s32.totalorder %s15, 3
      %p52 = por %p50, %p51
      %p53 = scmp.ne.s32.totalorder %s45, %s48
      %p54 = scmp.eq.s32.totalorder %s15, 0
      %p55 = por %p53, %p54
      %p56 = scmp.ne.s32.totalorder %s45, %s48
      %p57 = scmp.eq.s32.totalorder %s20, 3
      %p58 = por %p56, %p57
      %p59 = scmp.ne.s32.totalorder %s48, %s49
      %p60 = scmp.eq.s32.totalorder %s20, 0
      %p61 = por %p59, %p60
      %p62 = scmp.ne.s32.totalorder %s48, %s49
      %p63 = scmp.eq.s32.totalorder %s21, 3
      %p64 = por %p62, %p63
      %p66 = scmp.ne.s32.totalorder %s49, %s65
      %p67 = scmp.eq.s32.totalorder %s21, 0
      %p68 = por %p66, %p67
      %s69 = smul.u32 %s22, 2
      %s70 = sadd.s32 %s69, %s23
      %p71 = scmp.lt.s32.totalorder %s70, 2
      %s72 = scalar_select %p71, %s70, 2
      %s73 = smul.u32 %s34, 2
      %s74 = sadd.s32 %s73, %s30
      %p75 = scmp.lt.s32.totalorder %s74, 2
      %s76 = scalar_select %p75, %s74, 2
      %s77 = ssub.s32 %s72, %s76
      %p78 = scmp.eq.s32.totalorder %s77, 0
      %s80 = sadd.s32 %s79, 1
      %s81 = scalar_select %p78, %s79, %s80
      %p84 = pneg %p78
      %p85 = scmp.eq.s32.totalorder %s15, 3
      %p86 = por %p84, %p85
      %p87 = scmp.ne.s32.totalorder %s79, %s82
      %p88 = scmp.eq.s32.totalorder %s15, 0
      %p89 = por %p87, %p88
      %p90 = scmp.ne.s32.totalorder %s79, %s82
      %p91 = scmp.eq.s32.totalorder %s20, 3
      %p92 = por %p90, %p91
      %p93 = scmp.ne.s32.totalorder %s82, %s83
      %p94 = scmp.eq.s32.totalorder %s20, 0
      %p95 = por %p93, %p94
      %p96 = scmp.ne.s32.totalorder %s82, %s83
      %p97 = scmp.eq.s32.totalorder %s21, 3
      %p98 = por %p96, %p97
      %p100 = scmp.ne.s32.totalorder %s83, %s99
      %p101 = scmp.eq.s32.totalorder %s21, 0
      %p102 = por %p100, %p101
      %s104 = sadd.s32 %s103, 1
      %p107 = scmp.eq.s32.totalorder %s15, 3
      %p108 = scmp.ne.s32.totalorder %s103, %s105
      %p109 = scmp.eq.s32.totalorder %s15, 0
      %p110 = por %p108, %p109
      %p111 = scmp.ne.s32.totalorder %s103, %s105
      %p112 = scmp.eq.s32.totalorder %s20, 3
      %p113 = por %p111, %p112
      %p114 = scmp.ne.s32.totalorder %s105, %s106
      %p115 = scmp.eq.s32.totalorder %s20, 0
      %p116 = por %p114, %p115
      %p117 = scmp.ne.s32.totalorder %s105, %s106
      %p118 = scmp.eq.s32.totalorder %s21, 3
      %p119 = por %p117, %p118
      %p121 = scmp.ne.s32.totalorder %s106, %s120
      %p122 = scmp.eq.s32.totalorder %s21, 0
      %p123 = por %p121, %p122
      %s124 = ssub.s32 %s22, %s34
      %p125 = scmp.eq.s32.totalorder %s124, 0
      %s127 = sadd.s32 %s126, 1
      %s128 = scalar_select %p125, %s126, %s127
      %p131 = pneg %p125
      %p132 = scmp.eq.s32.totalorder %s15, 3
      %p133 = por %p131, %p132
      %p134 = scmp.ne.s32.totalorder %s126, %s129
      %p135 = scmp.eq.s32.totalorder %s15, 0
      %p136 = por %p134, %p135
      %p137 = scmp.ne.s32.totalorder %s126, %s129
      %p138 = scmp.eq.s32.totalorder %s20, 3
      %p139 = por %p137, %p138
      %p140 = scmp.ne.s32.totalorder %s129, %s130
      %p141 = scmp.eq.s32.totalorder %s20, 0
      %p142 = por %p140, %p141
      %p143 = scmp.ne.s32.totalorder %s129, %s130
      %p144 = scmp.eq.s32.totalorder %s21, 3
      %p145 = por %p143, %p144
      %p147 = scmp.ne.s32.totalorder %s130, %s146
      %p148 = scmp.eq.s32.totalorder %s21, 0
      %p149 = por %p147, %p148
      %p150 = scmp.le.s32.totalorder 1, %s15
      %p151 = scmp.lt.s32.totalorder %s15, 5
      %p152 = pnand %p150, %p151
      %p153 = pneg %p152
      // Predicated region
      $region9: #{tpu_custom_call.1} parent=5 // pred_check
        _
      $region10: #{tpu_custom_call.1} parent=5 // pred_check_branch
        %155 = sbr.rel (%p152) target = $region12
      $region11: #{tpu_custom_call.1} parent=5 // pred_region
        %s156 = ssub.s32 %s15, 1
        // Predicated region
        $region13: #{tpu_custom_call.1} parent=11 // pred_check
          %p157 = pneg %p116
        $region14: #{tpu_custom_call.1} parent=11 // pred_check_branch
          %159 = sbr.rel (%p157) target = $region16
        $region15: #{tpu_custom_call.1} parent=11 // pred_region
          _
        $region16: #{tpu_custom_call.1} parent=11 // pred_fallthru
          _
      $region12: #{tpu_custom_call.1} parent=5 // pred_fallthru
        _
      %p160 = scmp.lt.s32.totalorder %s15, 4
      // Predicated region
      $region17: #{tpu_custom_call.1} parent=5 // pred_check
        %p161 = pneg %p160
      $region18: #{tpu_custom_call.1} parent=5 // pred_check_branch
        %163 = sbr.rel (%p161) target = $region20
      $region19: #{tpu_custom_call.1} parent=5 // pred_region
        // Predicated region
        $region21: #{tpu_custom_call.1} parent=19 // pred_check
          %p164 = pneg %p55
        $region22: #{tpu_custom_call.1} parent=19 // pred_check_branch
          %166 = sbr.rel (%p164) target = $region24
        $region23: #{tpu_custom_call.1} parent=19 // pred_region
          %s167 = smul.u32 %s22, 2
          %s168 = sadd.s32 %s167, %s23
          %p169 = scmp.lt.s32.totalorder %s168, 2
          %s170 = scalar_select %p169, %s168, 2
          %p171 = scmp.lt.s32.totalorder %s170, 2
          %s172 = scalar_select %p171, %s170, 2
          %s173 = smul.addr %s172, 8
          %s174 = scalar_lea.vmem %s0, %s173
          %s175 = smul.u32 %s22, 2
          %s176 = sadd.s32 %s175, %s23
          %p177 = scmp.lt.s32.totalorder %s176, 2
          %s178 = scalar_select %p177, %s176, 2
        $region24: #{tpu_custom_call.1} parent=19 // pred_fallthru
          _
        // Predicated region
        $region25: #{tpu_custom_call.1} parent=19 // pred_check
          %p179 = pneg %p89
        $region26: #{tpu_custom_call.1} parent=19 // pred_check_branch
          %181 = sbr.rel (%p179) target = $region28
        $region27: #{tpu_custom_call.1} parent=19 // pred_region
          %s182 = sand.u32 %s79, 1
          %s183 = scalar_lea.sflag [#allocation4], %s182
          %s184 = sand.u32 %s79, 1
          %s185 = smul.addr %s184, 8
          %s186 = scalar_lea.vmem [#allocation3], %s185
          %s187 = smul.u32 %s22, 2
          %s188 = sadd.s32 %s187, %s23
          %p189 = scmp.lt.s32.totalorder %s188, 2
          %s190 = scalar_select %p189, %s188, 2
          %s192 = ssub.s32 128, 128
          %193 = vsyncadd %s183, %s192
          %s194 = smul.addr %s190, 128
          %s195 = scalar_lea.hbm %s1, %s194
          %s197 = sshll.u32 %s186, 4
          %s198 = int_to_ptr.vmem [resolvable:$true] %s197
          %200 = dma.hbm_to_vmem [thread:$0]  %s195, 128, %s198, %s183
        $region28: #{tpu_custom_call.1} parent=19 // pred_fallthru
          _
      $region20: #{tpu_custom_call.1} parent=5 // pred_fallthru
        _
      %p201 = scmp.le.s32.totalorder 1, %s15
      %p202 = scmp.lt.s32.totalorder %s15, 5
      %p203 = pnand %p201, %p202
      %p204 = pneg %p203
      // Predicated region
      $region29: #{tpu_custom_call.1} parent=5 // pred_check
        _
      $region30: #{tpu_custom_call.1} parent=5 // pred_check_branch
        %206 = sbr.rel (%p203) target = $region32
      $region31: #{tpu_custom_call.1} parent=5 // pred_region
        %s207 = ssub.s32 %s15, 1
        %s208 = sand.u32 %s82, 1
        %s209 = scalar_lea.sflag [#allocation4], %s208
        %s210 = sand.u32 %s82, 1
        %s211 = smul.addr %s210, 8
        %s212 = scalar_lea.vmem [#allocation3], %s211
        // Predicated region
        $region33: #{tpu_custom_call.1} parent=31 // pred_check
          %p213 = pneg %p95
        $region34: #{tpu_custom_call.1} parent=31 // pred_check_branch
          %215 = sbr.rel (%p213) target = $region36
        $region35: #{tpu_custom_call.1} parent=31 // pred_region
          %216 = dma.done %s209, 128
        $region36: #{tpu_custom_call.1} parent=31 // pred_fallthru
          _
        %s217 = smul.u32 %s24, 2
        %s218 = sadd.s32 %s217, %s25
        %p219 = scmp.lt.s32.totalorder %s218, 2
        %s220 = scalar_select %p219, %s218, 2
        %p221 = scmp.lt.s32.totalorder %s220, 2
        %s222 = scalar_select %p221, %s220, 2
        %s223 = smul.addr %s222, 8
        %s224 = scalar_lea.vmem %s0, %s223
        %p225 = pneg %p61
        %p226 = pneg %p58
        %s227 = sand.u32 %s82, 1
        %s228 = scalar_lea.sflag [#allocation4], %s227
        %s229 = sand.u32 %s82, 1
        %s230 = smul.addr %s229, 8
        %s231 = scalar_lea.vmem [#allocation3], %s230
        %p232 = pneg %p95
        %p233 = pneg %p92
        %p234 = pneg %p116
        %p235 = pneg %p113
        %p236 = pneg %p142
        %p237 = pneg %p139
        %s238 = sand.u32 %s129, 1
        %s239 = scalar_lea.sflag [#allocation5], %s238
        %s240 = sand.u32 %s129, 1
        %s241 = smul.addr %s240, 8
        %s242 = scalar_lea.vmem [#allocation6], %s241
        %s243 = smul.u32 %s24, 2
        %s244 = sadd.s32 %s243, %s25
        %p245 = scmp.lt.s32.totalorder %s244, 2
        %s246 = scalar_select %p245, %s244, 2
        %p247 = scmp.lt.s32.totalorder %s246, 2
        %s248 = scalar_select %p247, %s246, 2
        %s249 = smul.addr %s248, 8
        %s250 = scalar_lea.vmem %s0, %s249
        %s251 = smul.u32 %s24, 2
        %s252 = sadd.s32 %s251, %s25
        %p253 = scmp.lt.s32.totalorder %s252, 2
        %s254 = scalar_select %p253, %s252, 2
        %s255 = smul.u32 %s24, 2
        %s256 = sadd.s32 %s255, %s25
        %p257 = scmp.lt.s32.totalorder %s256, 2
        %s258 = scalar_select %p257, %s256, 2
        %p259 = scmp.eq.s32.totalorder %s25, 0
        // Predicated region
        $region37: #{tpu_custom_call.1} parent=31 // pred_check
          %p260 = pneg %p259
        $region38: #{tpu_custom_call.1} parent=31 // pred_check_branch
          %262 = sbr.rel (%p260) target = $region40
        $region39: #{tpu_custom_call.1} parent=31 // pred_region
          %vm263 = vcmask 0
          %264 = vst.msk [vmem:[#allocation2] sm:$0x1] %vm263, 0.0
        $region40: #{tpu_custom_call.1} parent=31 // pred_fallthru
          _
        %s265 = smul.u32 %s24, 2
        %s266 = sadd.s32 %s265, %s25
        %s267 = smul.u32 %s266, 8
        %p268 = scmp.lt.s32.totalorder %s267, 20
        // Predicated region
        $region41: #{tpu_custom_call.1} parent=31 // pred_check
          %p269 = pneg %p268
        $region42: #{tpu_custom_call.1} parent=31 // pred_check_branch
          %271 = sbr.rel (%p269) target = $region44
        $region43: #{tpu_custom_call.1} parent=31 // pred_region
          %v272 = vld [vmem:[%s250] sm:$0xff]
          %v273 = vld [vmem:[%s212] sm:$0xff]
          %s274 = scalar_lea.vmem %s2, %s267
          %v275 = vld [vmem:[%s274] sm:$0xff]
          %v276 = vsub.f32 %v272, %v273
          %v277 = vadd.f32 %v276, 1e-06
          %v278 = vmul.f32 %v277, %v277
          %279 = vadd.xlane.f32.xlu0 %v278
          %v280 = vpop.xlane.xlu0 %279
          %v281 = vrsqrt.pop %v280
          %v282 = vmul.f32 %v280, %v281
          %vm283 = vcmp.eq.f32.partialorder %v280, inf
          %v284 = vsel %vm283, %v280, %v282
          %vm285 = vcmp.eq.f32.partialorder %v280, 0.0
          %v286 = vand.u32 %v280, 2147483648
          %v287 = vsel %vm285, %v286, %v284
          %v288 = vsub.f32 1.0, %v275
          %v289 = vmul.f32 %v288, %v280
          %v290 = vsub.f32 2.0, %v287
          %v291 = vmax.f32 %v290, 0.0
          %v292 = vmul.f32 %v291, %v291
          %v293 = vmul.f32 %v275, %v292
          %v294 = vadd.f32 %v289, %v293
          %v295 = vlaneseq
          %v296 = vshrl.u32 %v295, 7
          %v297 = vstv %s267
          %v298 = vadd.s32 %v297, %v296
          %vm299 = vcmp.lt.s32.totalorder %v298, 20
          %v300 = vsel %vm299, %v294, 0.0
          %v301 = vld [vmem:[#allocation2] sm:$0x1]
          %vm302 = vcmask 7168
          %v303 = vsel %vm302, %v300, 0.0
          %304 = vadd.xlane.f32.xlu0 %v303
          %v305 = vpop.xlane.xlu0 %304
          %v306 = vrot.slane %v305, 4
          %v307 = vadd.f32 %v305, %v306
          %v308 = vrot.slane %v307, 2
          %v309 = vadd.f32 %v307, %v308
          %v310 = vrot.slane %v309, 1
          %v311 = vadd.f32 %v309, %v310
          %s312 = vtos %v311
          %v313 = vstv %s312
          %v314 = vadd.f32 %v301, %v313
          %vm315 = vcmask 0
          %316 = vst.msk [vmem:[#allocation2] sm:$0x1] %vm315, %v314
        $region44: #{tpu_custom_call.1} parent=31 // pred_fallthru
          _
        %p317 = scmp.eq.s32.totalorder %s25, 1
        // Predicated region
        $region45: #{tpu_custom_call.1} parent=31 // pred_check
          %p318 = pneg %p317
        $region46: #{tpu_custom_call.1} parent=31 // pred_check_branch
          %320 = sbr.rel (%p318) target = $region48
        $region47: #{tpu_custom_call.1} parent=31 // pred_region
          %v321 = vld [vmem:[#allocation2] sm:$0x1]
          %v322 = vmul.f32 %v321, 0.05
          %v324 = vlaneseq
          %v325 = vshrl.u32 %v324, 7
          %v326 = vsub.s32 0, %v325
          %v327 = vrot.slane %v322, %v326
          %328 = vset.pattern.permute.xlu0 0
          %329 = vperm.xlu0 %328, %v327
          %v330 = vpop.permute.xlu0 %329
          %332 = vst [vmem:[%s242] sm:$0xff] %v330
        $region48: #{tpu_custom_call.1} parent=31 // pred_fallthru
          _
        %s333 = sand.u32 %s129, 1
        %s334 = scalar_lea.sflag [#allocation5], %s333
        %s335 = sand.u32 %s129, 1
        %s336 = smul.addr %s335, 8
        %s337 = scalar_lea.vmem [#allocation6], %s336
        // Predicated region
        $region49: #{tpu_custom_call.1} parent=31 // pred_check
          %p338 = pneg %p139
        $region50: #{tpu_custom_call.1} parent=31 // pred_check_branch
          %340 = sbr.rel (%p338) target = $region52
        $region51: #{tpu_custom_call.1} parent=31 // pred_region
          %s342 = ssub.s32 128, 128
          %343 = vsyncadd %s334, %s342
          %s344 = smul.addr %s24, 128
          %s345 = scalar_lea.hbm %s3, %s344
          %s347 = sshll.u32 %s337, 4
          %s348 = int_to_ptr.vmem [resolvable:$true] %s347
          %350 = dma.vmem_to_hbm [thread:$0]  %s348, 128, %s345, %s334
        $region52: #{tpu_custom_call.1} parent=31 // pred_fallthru
          _
      $region32: #{tpu_custom_call.1} parent=5 // pred_fallthru
        _
      %p351 = scmp.le.s32.totalorder 2, %s15
      // Predicated region
      $region53: #{tpu_custom_call.1} parent=5 // pred_check
        %p352 = pneg %p351
      $region54: #{tpu_custom_call.1} parent=5 // pred_check_branch
        %354 = sbr.rel (%p352) target = $region56
      $region55: #{tpu_custom_call.1} parent=5 // pred_region
        %s355 = ssub.s32 %s15, 2
        // Predicated region
        $region57: #{tpu_custom_call.1} parent=55 // pred_check
          %p356 = pneg %p145
        $region58: #{tpu_custom_call.1} parent=55 // pred_check_branch
          %358 = sbr.rel (%p356) target = $region60
        $region59: #{tpu_custom_call.1} parent=55 // pred_region
          %s359 = sand.u32 %s130, 1
          %s360 = scalar_lea.sflag [#allocation5], %s359
          %s361 = sand.u32 %s130, 1
          %s362 = smul.addr %s361, 8
          %s363 = scalar_lea.vmem [#allocation6], %s362
          %364 = dma.done %s360, 128
        $region60: #{tpu_custom_call.1} parent=55 // pred_fallthru
          _
      $region56: #{tpu_custom_call.1} parent=5 // pred_fallthru
        _
    $region6: #{tpu_custom_call.1} parent=1 // loop_footer
      %s19 = sadd.s32 1, %s15
    $region7: #{tpu_custom_call.1} parent=1 // loop_footer_branch
      %14 = sbr.rel target = $region3
    $region8: #{tpu_custom_call.1} parent=1 // loop_exit
      _
    %365 = vsyncpa [#allocation4], 1
    %s366 = scalar_lea.sflag [#allocation4], 1
    %367 = vsyncpa %s366, 1
    %368 = vsyncpa [#allocation5], 1
    %s369 = scalar_lea.sflag [#allocation5], 1
    %370 = vsyncpa %s369, 1

</llo_original>
